<compile_context>
chip_gen: v7x
topology: tpu7x:2x2x1
jax: 0.10.0
libtpu: 0.0.40
codegen_flags: <defaults>
</compile_context>

<pallas_src>
import jax
import jax.numpy as jnp
from jax import lax
from jax.experimental import pallas as pl
from jax.experimental.pallas import tpu as pltpu


def _sqdist_kernel(x_ref, pt_ref, p2_ref, o_ref):
    # x_ref : (TN, L)      row tile of the flattened input (compute dtype)
    # pt_ref: (L, P_pad)   pre-transposed, zero-padded prototypes (resident every step)
    # p2_ref: (1, P_pad)   hoisted prototype squared norms (f32, resident)
    # o_ref : (TN, P_pad)  lane-dense output tile
    x = x_ref[...]

    # (TN, L) @ (L, P_pad) on the MXU, accumulating in f32. Prototypes are
    # already transposed in the wrapper, so no in-kernel re-layout is needed.
    xp = lax.dot_general(
        x, pt_ref[...],
        dimension_numbers=(((1,), (0,)), ((), ())),
        preferred_element_type=jnp.float32,
    )  # (TN, P_pad), f32

    # Per-row squared norms, accumulated in f32 on the VPU.
    xf = x.astype(jnp.float32)
    x2 = jnp.sum(xf * xf, axis=-1, keepdims=True)  # (TN, 1)

    d2 = x2 + p2_ref[...] - 2.0 * xp
    # cdist(p=2)**2 is non-negative; clamp tiny negative fp error.
    o_ref[...] = jnp.maximum(d2, 0.0).astype(o_ref.dtype)


def prototype_forward(inp, prototypes, *, tn=4096):
    """Pallas equivalent of Prototype.forward.

    inp        : any shape whose trailing dim is latent_size (viewed as (-1, L))
    prototypes : (P, L) learned prototypes
    returns    : (dis_2 of shape (N, P), prototypes)
    """
    P, L = prototypes.shape
    x = inp.reshape(-1, L)
    N = x.shape[0]

    # torch.cdist returns the (promoted) input dtype; match it (also halves the
    # dominant output write stream when the model runs in bf16).
    cdtype = jnp.promote_types(x.dtype, prototypes.dtype)
    x_c = x if x.dtype == cdtype else x.astype(cdtype)
    protos_c = prototypes if prototypes.dtype == cdtype else prototypes.astype(cdtype)

    # ---- lane-dense output: pad P up to a multiple of 128 with zero prototypes ----
    P_pad = max(128, ((P + 127) // 128) * 128)

    # Pre-transpose once in XLA (free) so the kernel contracts (TN,L)@(L,P_pad).
    protosT = protos_c.T  # (L, P)
    if P_pad != P:
        protosT = jnp.pad(protosT, ((0, 0), (0, P_pad - P)))  # zero prototypes

    # Hoisted prototype squared norms (computed once, outside the grid), f32.
    p2 = jnp.sum(protosT.astype(jnp.float32) ** 2, axis=0, keepdims=True)  # (1, P_pad)

    in_bytes = jnp.dtype(cdtype).itemsize
    out_bytes = in_bytes

    # ---- row-tile size: large (amortize ~0.35us/step) within a VMEM budget ----
    # Budget counts double-buffered x / output tiles plus the (double-buffered)
    # resident prototype + norm blocks.
    vmem_budget = 24 << 20
    fixed_bytes = 2 * (L * P_pad * in_bytes) + 2 * (P_pad * 4)
    per_row_bytes = 2 * (L * in_bytes + P_pad * out_bytes)
    if vmem_budget > fixed_bytes:
        tn_budget = max(8, ((vmem_budget - fixed_bytes) // per_row_bytes) // 8 * 8)
    else:
        # A huge (L, P_pad) prototype block would want a second grid axis over P
        # (and single-buffered invariant blocks); not needed for realistic
        # Prototype sizes, so fall back to the minimum row tile.
        tn_budget = 8
    TN = min(int(tn), int(tn_budget))

    # Keep >=2 (ideally ~4) grid steps when there are enough rows so the
    # "parallel" axis can feed both v7x TensorCores; never below 256 rows/step.
    if N >= 2 * 256:
        tn_steps = ((-(-N // 4)) + 7) // 8 * 8
        TN = min(TN, max(256, tn_steps))

    # Clamp to the un-padded row count and sublane-align. No padded copy of x is
    # made: Pallas masks the trailing partial block on writeback, so padded rows
    # never escape (saves a full extra HBM read+write pass over x).
    if N >= 8:
        TN = max(8, min(TN, (N // 8) * 8))
    else:
        TN = N  # a block equal to the full (short) first dim is allowed

    grid = (pl.cdiv(N, TN),)

    needed = fixed_bytes + TN * per_row_bytes
    vmem_limit = int(max(32 << 20, needed + (4 << 20)))

    cost = pl.CostEstimate(
        flops=2 * N * P_pad * L + 3 * N * P_pad + 2 * N * L,
        transcendentals=0,
        bytes_accessed=(
            N * L * in_bytes + L * P_pad * in_bytes + P_pad * 4 + N * P_pad * out_bytes
        ),
    )

    out = pl.pallas_call(
        _sqdist_kernel,
        out_shape=jax.ShapeDtypeStruct((N, P_pad), cdtype),
        grid=grid,
        in_specs=[
            pl.BlockSpec((TN, L), lambda i: (i, 0)),      # streamed x row tiles
            pl.BlockSpec((L, P_pad), lambda i: (0, 0)),   # resident prototypes^T
            pl.BlockSpec((1, P_pad), lambda i: (0, 0)),   # resident proto norms
        ],
        out_specs=pl.BlockSpec((TN, P_pad), lambda i: (i, 0)),
        compiler_params=pltpu.CompilerParams(
            dimension_semantics=("parallel",),
            vmem_limit_bytes=vmem_limit,
        ),
        cost_estimate=cost,
    )(x_c, protosT, p2)

    # Fast path: if P is already lane-aligned, return the kernel output directly
    # (no extra HBM copy). Otherwise a single column slice restores the exact
    # (N, P) module output; downstream code that tolerates padded columns could
    # consume `out` as-is to avoid this copy too.
    dis_2 = out if P_pad == P else out[:, :P]
    return dis_2, prototypes


if __name__ == "__main__":
    key = jax.random.PRNGKey(0)
    k_proto, k_x = jax.random.split(key)

    prototype_num = 16
    latent_size = 32

    # deterministic parameter init matching torch.rand(P, L)  (uniform [0, 1))
    prototypes = jax.random.uniform(
        k_proto, (prototype_num, latent_size), dtype=jnp.float32
    )

    # small example input: batch=2, seq=4, latent=32  -> flattened to (8, 32)
    x = jax.random.normal(k_x, (2, 4, latent_size), dtype=jnp.float32)

    dis_2, protos_out = prototype_forward(x, prototypes)
    jax.block_until_ready(dis_2)

    # sanity check vs. pure-JAX reference
    xf = x.reshape(-1, latent_size)
    ref = (
        jnp.sum(xf * xf, axis=-1, keepdims=True)
        + jnp.sum(prototypes * prototypes, axis=-1)[None, :]
        - 2.0 * xf @ prototypes.T
    )
    ref = jnp.maximum(ref, 0.0)
    assert dis_2.shape == (8, prototype_num)
    assert dis_2.dtype == x.dtype
    assert protos_out.shape == (prototype_num, latent_size)
    assert jnp.allclose(dis_2, ref, atol=1e-4, rtol=1e-4)

    print("KERNEL_OK")
</pallas_src>

<mosaic_0001>
module attributes {stable_mosaic.version = 11 : i64} {
  func.func @_sqdist_kernel(%arg0: i32, %arg1: memref<8x32xf32, #tpu.memory_space<vmem>>, %arg2: memref<32x128xf32, #tpu.memory_space<vmem>>, %arg3: memref<1x128xf32, #tpu.memory_space<vmem>>, %arg4: memref<8x128xf32, #tpu.memory_space<vmem>>) attributes {dimension_semantics = [#tpu.dimension_semantics<parallel>], iteration_bounds = array<i64: 1>, scalar_prefetch = 0 : i64, scratch_operands = 0 : i64, tpu.core_type = #tpu.core_type<tc>, window_params = [{transform_indices = @transform_0, window_bounds = array<i64: 8, 32>}, {pipeline_mode = #tpu.pipeline_mode<synchronous>, transform_indices = @transform_1, window_bounds = array<i64: 32, 128>}, {pipeline_mode = #tpu.pipeline_mode<synchronous>, transform_indices = @transform_2, window_bounds = array<i64: 1, 128>}, {transform_indices = @transform_3, window_bounds = array<i64: 8, 128>}]} {
    %c0 = arith.constant 0 : index
    %c0_0 = arith.constant 0 : index
    %0 = vector.load %arg1[%c0, %c0_0] : memref<8x32xf32, #tpu.memory_space<vmem>>, vector<8x32xf32>
    %c0_1 = arith.constant 0 : index
    %c0_2 = arith.constant 0 : index
    %1 = vector.load %arg2[%c0_1, %c0_2] : memref<32x128xf32, #tpu.memory_space<vmem>>, vector<32x128xf32>
    %cst = arith.constant dense<0.000000e+00> : vector<8x128xf32>
    %2 = tpu.matmul %0, %1, %cst {dimension_numbers = #tpu.dot_dimension_numbers<[1], [0], [0], [1], [0, 0, 1, 1], [], []>} : vector<8x32xf32>, vector<32x128xf32>, vector<8x128xf32> -> vector<8x128xf32>
    %3 = arith.mulf %0, %0 : vector<8x32xf32>
    %cst_3 = arith.constant dense<0.000000e+00> : vector<8xf32>
    %4 = vector.multi_reduction <add>, %3, %cst_3 [1] : vector<8x32xf32> to vector<8xf32>
    %5 = vector.shape_cast %4 : vector<8xf32> to vector<8x1xf32>
    %c0_4 = arith.constant 0 : index
    %c0_5 = arith.constant 0 : index
    %6 = vector.load %arg3[%c0_4, %c0_5] : memref<1x128xf32, #tpu.memory_space<vmem>>, vector<1x128xf32>
    %7 = vector.broadcast %5 : vector<8x1xf32> to vector<8x128xf32>
    %8 = vector.broadcast %6 : vector<1x128xf32> to vector<8x128xf32>
    %9 = arith.addf %7, %8 : vector<8x128xf32>
    %cst_6 = arith.constant 2.000000e+00 : f32
    %10 = vector.broadcast %cst_6 : f32 to vector<8x128xf32>
    %11 = arith.mulf %10, %2 : vector<8x128xf32>
    %12 = arith.subf %9, %11 : vector<8x128xf32>
    %cst_7 = arith.constant 0.000000e+00 : f32
    %13 = vector.broadcast %cst_7 : f32 to vector<8x128xf32>
    %14 = arith.maximumf %12, %13 : vector<8x128xf32>
    %c0_8 = arith.constant 0 : index
    %c0_9 = arith.constant 0 : index
    %15 = vector.load %arg4[%c0_8, %c0_9] : memref<8x128xf32, #tpu.memory_space<vmem>>, vector<8x128xf32>
    tpu.vector_store %arg4[%c0_8, %c0_9], %14 {strides = array<i32>} : memref<8x128xf32, #tpu.memory_space<vmem>>, vector<8x128xf32>,
    return
  }
  func.func @transform_0(%arg0: i32) -> (i32, i32) {
    %c0_i32 = arith.constant 0 : i32
    %c0_i32_0 = arith.constant 0 : i32
    return %arg0, %c0_i32 : i32, i32
  }
  func.func @transform_1(%arg0: i32) -> (i32, i32) {
    %c0_i32 = arith.constant 0 : i32
    %c0_i32_0 = arith.constant 0 : i32
    %c0_i32_1 = arith.constant 0 : i32
    return %c0_i32, %c0_i32_0 : i32, i32
  }
  func.func @transform_2(%arg0: i32) -> (i32, i32) {
    %c0_i32 = arith.constant 0 : i32
    %c0_i32_0 = arith.constant 0 : i32
    %c0_i32_1 = arith.constant 0 : i32
    return %c0_i32, %c0_i32_0 : i32, i32
  }
  func.func @transform_3(%arg0: i32) -> (i32, i32) {
    %c0_i32 = arith.constant 0 : i32
    %c0_i32_0 = arith.constant 0 : i32
    return %arg0, %c0_i32 : i32, i32
  }
}

</mosaic_0001>

<llo_original>
// kernel: tpu_custom_call.1
$region0: #{tpu_custom_call.1}
  #allocation0 [shape = 'u32[]', space=smem, size = 0x4, offset = 0x4, fixed_abs, tag = 'smem constant byte address 0x4 - core index']
  #allocation1 [shape = 'u32[144,128]{1,0:T(1,128)}', space=vmem, size = 0x12000, scoped, tag = 'internal scratch']
  %s0 = inlined_call_operand.hbm [shape: f32[8,32], index: 0, kind: input, shape index: {}]
  %s1 = inlined_call_operand.hbm [shape: f32[32,128], index: 1, kind: input, shape index: {}]
  %s2 = inlined_call_operand.vmem [shape: f32[1,128], index: 2, kind: input, shape index: {}]
  %s3 = inlined_call_operand.hbm [shape: f32[8,128], index: 3, kind: output, shape index: {}]
  %s4 = sld [smem:[#allocation0]]
  $region30: #{tpu_custom_call.1} parent=0
    _
  %s6 = ssub.s32 1, %s4
  %s7 = scalar_select 0, %s6, %s4
  $region1: #{tpu_custom_call.1} parent=0
    #allocation2 [shape = 'u8[4096]{0}', space=vmem, size = 0x1000, scoped, tag = 'input window, operand 0, single buffered']
    #allocation3 [shape = 's32[1]{0}', space=sflag, size = 0x4, scoped, tag = 'scoped memory for tpu_custom_call.1']
    #allocation4 [shape = 's32[1]{0}', space=sflag, size = 0x4, scoped, tag = 'scoped memory for tpu_custom_call.1']
    #allocation5 [shape = 'u8[16384]{0}', space=vmem, size = 0x4000, scoped, tag = 'input window, operand 1, single buffered']
    #allocation6 [shape = 's32[1]{0}', space=sflag, size = 0x4, scoped, tag = 'scoped memory for tpu_custom_call.1']
    #allocation7 [shape = 'u8[4096]{0}', space=vmem, size = 0x1000, scoped, tag = 'output window, operand 0, single buffered']
    %8 = vsyncpa [#allocation3], 0
    %9 = vsyncpa [#allocation6], 0
    %10 = vsyncpa [#allocation4], 0
    // Predicated region
    $region2: #{tpu_custom_call.1} parent=1 // pred_check
      _
    $region3: #{tpu_custom_call.1} parent=1 // pred_check_branch
      %12 = sbr.rel (0) target = $region5
    $region4: #{tpu_custom_call.1} parent=1 // pred_region
      %s14 = ssub.s32 128, 128
      %15 = vsyncadd [#allocation3], %s14
      %s17 = sshll.u32 [#allocation2], 4
      %s18 = int_to_ptr.vmem [resolvable:$true] %s17
      %20 = dma.hbm_to_vmem [thread:$0]  %s0, 128, %s18, [#allocation3]
    $region5: #{tpu_custom_call.1} parent=1 // pred_fallthru
      _
    // Predicated region
    $region6: #{tpu_custom_call.1} parent=1 // pred_check
      _
    $region7: #{tpu_custom_call.1} parent=1 // pred_check_branch
      %22 = sbr.rel (0) target = $region9
    $region8: #{tpu_custom_call.1} parent=1 // pred_region
      %s24 = ssub.s32 512, 512
      %25 = vsyncadd [#allocation6], %s24
      %s26 = sshll.u32 [#allocation5], 4
      %s27 = int_to_ptr.vmem [resolvable:$true] %s26
      %32 = dma.hbm_to_vmem [thread:$0]  %s1, 512, %s27, [#allocation6], 128, 128, 8
    $region9: #{tpu_custom_call.1} parent=1 // pred_fallthru
      _
    // Predicated region
    $region10: #{tpu_custom_call.1} parent=1 // pred_check
      _
    $region11: #{tpu_custom_call.1} parent=1 // pred_check_branch
      %34 = sbr.rel (0) target = $region13
    $region12: #{tpu_custom_call.1} parent=1 // pred_region
      _
    $region13: #{tpu_custom_call.1} parent=1 // pred_fallthru
      _
    // Predicated region
    $region14: #{tpu_custom_call.1} parent=1 // pred_check
      _
    $region15: #{tpu_custom_call.1} parent=1 // pred_check_branch
      %36 = sbr.rel (0) target = $region17
    $region16: #{tpu_custom_call.1} parent=1 // pred_region
      %37 = dma.done [#allocation3], 128
    $region17: #{tpu_custom_call.1} parent=1 // pred_fallthru
      _
    // Predicated region
    $region18: #{tpu_custom_call.1} parent=1 // pred_check
      _
    $region19: #{tpu_custom_call.1} parent=1 // pred_check_branch
      %39 = sbr.rel (0) target = $region21
    $region20: #{tpu_custom_call.1} parent=1 // pred_region
      %40 = dma.done [#allocation6], 512
    $region21: #{tpu_custom_call.1} parent=1 // pred_fallthru
      _
    %v41 = vld [vmem:[#allocation2] sm:$0xff]
    %v42 = vld [vmem:[#allocation5] sm:$0xff]
    %v43 = vld [vmem:[#allocation5 + $0x8] sm:$0xff]
    %v44 = vld [vmem:[#allocation5 + $0x10] sm:$0xff]
    %v45 = vld [vmem:[#allocation5 + $0x18] sm:$0xff]
    %vm46 = vcmask 261120
    %v48 = vsel %vm46, %v41, 0
    %50 = vmatprep.subr.mxu0 0.0
    %51 = vmatpush1.msra.mxu0 %v42
    %52 = vmatprep.subr.mxu0 0.0
    %53 = vmatpush1.msra.mxu0 %v43
    %54 = vmatprep.subr.mxu0 0.0
    %55 = vmatpush1.msra.mxu0 %v44
    %56 = vmatprep.subr.mxu0 0.0
    %57 = vmatpush1.msra.mxu0 %v45
    %58 = vmatprep.subr.mxu0 0.0
    %59 = vmatpush1.msra.mxu0 0.0
    %60 = vmatprep.subr.mxu0 0.0
    %61 = vmatpush1.msra.mxu0 0.0
    %62 = vmatprep.subr.mxu0 0.0
    %63 = vmatpush1.msra.mxu0 0.0
    %64 = vmatprep.subr.mxu0 0.0
    %65 = vmatpush1.msra.mxu0 0.0
    %66 = vmatprep.subr.mxu0 0.0
    %67 = vmatpush1.msra.mxu0 0.0
    %68 = vmatprep.subr.mxu0 0.0
    %69 = vmatpush1.msra.mxu0 0.0
    %70 = vmatprep.subr.mxu0 0.0
    %71 = vmatpush1.msra.mxu0 0.0
    %72 = vmatprep.subr.mxu0 0.0
    %73 = vmatpush1.msra.mxu0 0.0
    %74 = vmatprep.subr.mxu0 0.0
    %75 = vmatpush1.msra.mxu0 0.0
    %76 = vmatprep.subr.mxu0 0.0
    %77 = vmatpush1.msra.mxu0 0.0
    %78 = vmatprep.subr.mxu0 0.0
    %79 = vmatpush1.msra.mxu0 0.0
    %80 = vmatprep.subr.mxu0 0.0
    %81 = vmatpush1.msra.mxu0 0.0
    %82 = vmatprep.subr.mxu0 0.0
    %83 = vmatpush1.msra.mxu0 0.0
    %84 = vmatprep.subr.mxu0 0.0
    %85 = vmatpush1.msra.mxu0 0.0
    %86 = vmatprep.subr.mxu0 0.0
    %87 = vmatpush1.msra.mxu0 0.0
    %88 = vmatprep.subr.mxu0 0.0
    %89 = vmatpush1.msra.mxu0 0.0
    %90 = vmatprep.subr.mxu0 0.0
    %91 = vmatpush1.msra.mxu0 0.0
    %92 = vmatprep.subr.mxu0 0.0
    %93 = vmatpush1.msra.mxu0 0.0
    %94 = vmatprep.subr.mxu0 0.0
    %95 = vmatpush1.msra.mxu0 0.0
    %96 = vmatprep.subr.mxu0 0.0
    %97 = vmatpush1.msra.mxu0 0.0
    %98 = vmatprep.subr.mxu0 0.0
    %99 = vmatpush1.msra.mxu0 0.0
    %100 = vmatprep.subr.mxu0 0.0
    %101 = vmatpush1.msra.mxu0 0.0
    %102 = vmatprep.subr.mxu0 0.0
    %103 = vmatpush1.msra.mxu0 0.0
    %104 = vmatprep.subr.mxu0 0.0
    %105 = vmatpush1.msra.mxu0 0.0
    %106 = vmatprep.subr.mxu0 0.0
    %107 = vmatpush1.msra.mxu0 0.0
    %108 = vmatprep.subr.mxu0 0.0
    %109 = vmatpush1.msra.mxu0 0.0
    %110 = vmatprep.subr.mxu0 0.0
    %111 = vmatpush1.msra.mxu0 0.0
    %112 = vmatprep.subr.mxu0 0.0
    %113 = vmatpush1.msra.mxu0 0.0
    %114 = vmatprep.mubr.f32.mxu0 0.0
    %115 = vmatmul.mubr.f32.gmra.mrb[0].mxu0 %v48
    %v116 = vpop.f32.mrb[0].mxu0
    %v117 = vadd.f32 0.0, %v116
    %v118 = vpop.f32.mrb[0].mxu0
    %119 = vdwg.mxu0
    %v120 = vmul.f32 %v41, %v41
    %v121 = vsel %vm46, %v120, 0.0
    %122 = vadd.xlane.f32.xlu0 %v121
    %v123 = vpop.xlane.xlu0 %122
    %v124 = vld [vmem:[%s2] sm:$0x1]
    %v126 = vlaneseq
    %v127 = vshrl.u32 %v126, 7
    %v128 = vsub.s32 0, %v127
    %v129 = vrot.slane %v124, %v128
    %v131 = vadd.f32 %v123, %v129
    %v132 = vmul.f32 %v117, 2.0
    %v133 = vsub.f32 %v131, %v132
    %v134 = vmax.f32 %v133, 0.0
    %135 = vst [vmem:[#allocation7] sm:$0xff] %v134
    // Predicated region
    $region22: #{tpu_custom_call.1} parent=1 // pred_check
      _
    $region23: #{tpu_custom_call.1} parent=1 // pred_check_branch
      %137 = sbr.rel (0) target = $region25
    $region24: #{tpu_custom_call.1} parent=1 // pred_region
      %s139 = ssub.s32 128, 128
      %140 = vsyncadd [#allocation4], %s139
      %s142 = sshll.u32 [#allocation7], 4
      %s143 = int_to_ptr.vmem [resolvable:$true] %s142
      %145 = dma.vmem_to_hbm [thread:$0]  %s143, 128, %s3, [#allocation4]
    $region25: #{tpu_custom_call.1} parent=1 // pred_fallthru
      _
    // Predicated region
    $region26: #{tpu_custom_call.1} parent=1 // pred_check
      _
    $region27: #{tpu_custom_call.1} parent=1 // pred_check_branch
      %147 = sbr.rel (0) target = $region29
    $region28: #{tpu_custom_call.1} parent=1 // pred_region
      %148 = dma.done [#allocation4], 128
    $region29: #{tpu_custom_call.1} parent=1 // pred_fallthru
      _
    %149 = vsyncpa [#allocation3], 1
    %150 = vsyncpa [#allocation6], 1
    %151 = vsyncpa [#allocation4], 1

</llo_original>
